<compile_context>
chip_gen: v7x
topology: tpu7x:2x2x1
jax: 0.10.0
libtpu: 0.0.40
codegen_flags: <defaults>
</compile_context>

<pallas_src>
import functools

import jax
import jax.numpy as jnp
from jax.experimental import pallas as pl
from jax.experimental.pallas import tpu as pltpu


def _round_up(x, m):
    return (x + m - 1) // m * m


# ----------------------------- Pallas kernel ---------------------------------
def _text_embed_fc_kernel(ids_ref, emb_hbm, g1b1_ref, w_ref, p2_ref, o_ref,
                          x_buf, sem, *, eps, d_true, h_true, row_tile):
    """gather(emb rows) -> LN(D) -> Dropout(identity, eval) -> Linear(D->H, bf16 MXU)
       -> ReLU -> LN(H).

    ids_ref : (Np,) int32 SMEM (scalar prefetch)   token ids (padded slots = 0)
    emb_hbm : (V, Dp) f32 HBM (pl.ANY)             zero-padded embedding table
    g1b1    : (2, Dp) f32 [gamma1; beta1]          zero in padded lanes
    w       : (Dp, Hp) bf16                        zero in padded rows/cols
    p2      : (3, Hp) f32 [fc bias; gamma2; beta2] zero in padded lanes
    o_ref   : (row_tile, Hp)
    x_buf   : (row_tile, Dp) f32 VMEM scratch (gather landing buffer)
    sem     : scalar DMA semaphore
    """
    i = pl.program_id(0)
    base = i * row_tile

    # ---- fused embedding gather: one row-granular DMA per token -------------
    @pl.loop(0, row_tile)
    def _start(r):
        idx = ids_ref[base + r]
        pltpu.make_async_copy(
            emb_hbm.at[pl.ds(idx, 1), :],
            x_buf.at[pl.ds(r, 1), :],
            sem,
        ).start()

    @pl.loop(0, row_tile)
    def _wait(r):
        # wait amount depends only on the descriptor shape, not the src index
        pltpu.make_async_copy(
            emb_hbm.at[pl.ds(0, 1), :],
            x_buf.at[pl.ds(0, 1), :],
            sem,
        ).wait()
    # TODO(synk): cross-grid-step gather prefetch (double-buffered x_buf) if the
    # grid axis is made "arbitrary"; with "parallel" megacore sharding a step
    # cannot assume the previous step ran on the same core.

    x = x_buf[...]                                         # (rt, Dp) f32

    # ---- LayerNorm over word_vec_size (two-pass, padded lanes masked) -------
    mask_d = jax.lax.broadcasted_iota(jnp.int32, (1, x.shape[-1]), 1) < d_true
    inv_d = 1.0 / float(d_true)
    mu = jnp.sum(x, axis=-1, keepdims=True) * inv_d        # padded lanes are zero
    xc = jnp.where(mask_d, x - mu, 0.0)
    var = jnp.sum(xc * xc, axis=-1, keepdims=True) * inv_d
    gb = g1b1_ref[...]
    xn = xc * jax.lax.rsqrt(var + eps) * gb[0:1, :] + gb[1:2, :]
    # padded lanes of xn are exactly 0 -> zero-padded rows of W contribute nothing

    # ---- Dropout: identity at inference --------------------------------------
    # TODO(synk): training-mode dropout (pltpu.prng_random_bits mask) not implemented.

    # ---- Linear: bf16 operands, f32 MXU accumulation, then ReLU --------------
    pp = p2_ref[...]
    h = jnp.dot(xn.astype(jnp.bfloat16), w_ref[...],
                preferred_element_type=jnp.float32) + pp[0:1, :]
    h = jnp.maximum(h, 0.0)                                 # padded lanes stay 0

    # ---- LayerNorm over hidden_size ------------------------------------------
    mask_h = jax.lax.broadcasted_iota(jnp.int32, (1, h.shape[-1]), 1) < h_true
    inv_h = 1.0 / float(h_true)
    mu2 = jnp.sum(h, axis=-1, keepdims=True) * inv_h
    hc = jnp.where(mask_h, h - mu2, 0.0)
    var2 = jnp.sum(hc * hc, axis=-1, keepdims=True) * inv_h
    hn = hc * jax.lax.rsqrt(var2 + eps) * pp[1:2, :] + pp[2:3, :]
    o_ref[...] = hn.astype(o_ref.dtype)


# ------------------------------ tile / VMEM sizing ----------------------------
def _physical_vmem_bytes():
    try:
        info = pltpu.get_tpu_info()
        phys = int(getattr(info, "vmem_capacity_bytes", 0) or 0)
        if phys <= 0:
            phys = 64 << 20
    except Exception:
        phys = 64 << 20          # conservative: assume v7x's 64 MiB per core
    return phys


def _choose_row_tile(n_rows, d_pad, h_pad, max_row_tile, vmem_cap):
    """Largest row tile (multiple of 8) under the VMEM cap, targeting ~4 grid steps
    so the 'parallel' axis actually shards across v7x's two TensorCores."""

    def vmem_bytes(rt):
        weight = 2 * d_pad * h_pad * 2               # bf16 weight, double-buffered alloc
        params = 2 * (2 * d_pad + 3 * h_pad) * 4     # packed LN/bias blocks (db'd)
        out_io = 2 * rt * h_pad * 4                  # f32 output tile, double-buffered
        gather = rt * d_pad * 4                      # gather landing scratch
        temps = rt * (d_pad + 2 * h_pad) * 4         # compiler-materialized xn / h / hn
        return weight + params + out_io + gather + temps

    n8 = _round_up(max(n_rows, 1), 8)
    rt = min(max_row_tile, max(8, _round_up(pl.cdiv(n8, 4), 8)))
    rt = max(8, (rt // 8) * 8)
    while rt > 8 and vmem_bytes(rt) > vmem_cap:
        rt = max(8, (rt // 2 // 8) * 8)
    # TODO(synk): column-tile Hp (second grid axis + cross-tile LN2 partials) when
    # the resident bf16 weight alone exceeds the cap (very large D*H on v7x).
    return rt, vmem_bytes(rt)


# ------------------------------ wrapper ---------------------------------------
def text_embedding_forward(input_ids, params, *, eps=1e-12, max_row_tile=512,
                           out_dtype=jnp.float32):
    """Full TextEmbedding.forward.   input_ids: (B, L) int -> (B, L, hidden_size)."""
    emb_table = params["emb"]                    # (V, D) f32, row 0 = padding row
    g1, b1 = params["ln1_g"], params["ln1_b"]    # (D,)
    w, bw = params["fc_w"], params["fc_b"]       # (D, H), (H,)
    g2, b2 = params["ln2_g"], params["ln2_b"]    # (H,)

    B, L = input_ids.shape
    V, D = emb_table.shape
    H = w.shape[1]
    N = B * L

    # lane-dense padding of the feature axes (multiples of 128)
    Dp = _round_up(D, 128)
    Hp = _round_up(H, 128)

    phys = _physical_vmem_bytes()
    vmem_cap = max(24 << 20, phys - (28 << 20))  # headroom for compiler scratch
    row_tile, vmem_needed = _choose_row_tile(N, Dp, Hp, max_row_tile, vmem_cap)
    Np = _round_up(N, row_tile)

    # Zero-padded parameters (padded lanes zero -> fused LN / matmul stay exact).
    # NOTE: for a real model, pre-pad these once instead of per call.
    emb_p = jnp.pad(emb_table, ((0, 0), (0, Dp - D)))                          # (V, Dp)
    g1b1 = jnp.stack([jnp.pad(g1, (0, Dp - D)), jnp.pad(b1, (0, Dp - D))])     # (2, Dp)
    w_p = jnp.pad(w, ((0, Dp - D), (0, Hp - H))).astype(jnp.bfloat16)          # (Dp, Hp)
    p2 = jnp.stack([jnp.pad(bw, (0, Hp - H)), jnp.pad(g2, (0, Hp - H)),
                    jnp.pad(b2, (0, Hp - H))])                                 # (3, Hp)

    # Token ids (scalar-prefetched to SMEM); padded slots look up row 0 (zeros).
    ids_flat = jnp.pad(input_ids.reshape(-1).astype(jnp.int32), (0, Np - N))

    grid = (Np // row_tile,)
    vmem_limit = int(min(phys - (2 << 20), max(vmem_needed + (8 << 20), 32 << 20)))

    kernel = functools.partial(_text_embed_fc_kernel, eps=eps, d_true=D,
                               h_true=H, row_tile=row_tile)

    out = pl.pallas_call(
        kernel,
        out_shape=jax.ShapeDtypeStruct((Np, Hp), out_dtype),
        grid_spec=pltpu.PrefetchScalarGridSpec(
            num_scalar_prefetch=1,
            grid=grid,
            in_specs=[
                pl.BlockSpec(memory_space=pl.ANY),               # embedding table (HBM)
                pl.BlockSpec((2, Dp), lambda i, ids: (0, 0)),    # ln1 gamma/beta
                pl.BlockSpec((Dp, Hp), lambda i, ids: (0, 0)),   # linear weight (bf16, resident)
                pl.BlockSpec((3, Hp), lambda i, ids: (0, 0)),    # fc bias + ln2 gamma/beta
            ],
            out_specs=pl.BlockSpec((row_tile, Hp), lambda i, ids: (i, 0)),
            scratch_shapes=[
                pltpu.VMEM((row_tile, Dp), jnp.float32),          # gather landing buffer
                pltpu.SemaphoreType.DMA(()),
            ],
        ),
        compiler_params=pltpu.CompilerParams(
            dimension_semantics=("parallel",),
            vmem_limit_bytes=vmem_limit,
        ),
    )(ids_flat, emb_p, g1b1, w_p, p2)

    if Np == N and Hp == H:
        return out.reshape(B, L, H)
    return out[:N, :H].reshape(B, L, H)


# ------------------------- deterministic parameter init -----------------------
def init_params(key, vocab_size, word_vec_size, hidden_size):
    k_emb, k_w, k_b = jax.random.split(key, 3)
    emb = jax.random.normal(k_emb, (vocab_size, word_vec_size), jnp.float32) * 0.02
    emb = emb.at[0].set(0.0)                     # padding_idx=0 row is zeros
    fc_w = jax.random.normal(k_w, (word_vec_size, hidden_size), jnp.float32) * 0.05
    fc_b = jax.random.normal(k_b, (hidden_size,), jnp.float32) * 0.01
    return {
        "emb": emb,
        "ln1_g": jnp.ones((word_vec_size,), jnp.float32),
        "ln1_b": jnp.zeros((word_vec_size,), jnp.float32),
        "fc_w": fc_w,
        "fc_b": fc_b,
        "ln2_g": jnp.ones((hidden_size,), jnp.float32),
        "ln2_b": jnp.zeros((hidden_size,), jnp.float32),
    }


# ------------------------------ reference (pure JAX) ---------------------------
def reference_forward(input_ids, params, eps=1e-12):
    x = jnp.take(params["emb"], input_ids.reshape(-1), axis=0)
    mu = x.mean(-1, keepdims=True)
    var = ((x - mu) ** 2).mean(-1, keepdims=True)
    x = (x - mu) / jnp.sqrt(var + eps) * params["ln1_g"] + params["ln1_b"]
    h = x @ params["fc_w"] + params["fc_b"]
    h = jnp.maximum(h, 0.0)
    mu2 = h.mean(-1, keepdims=True)
    var2 = ((h - mu2) ** 2).mean(-1, keepdims=True)
    h = (h - mu2) / jnp.sqrt(var2 + eps) * params["ln2_g"] + params["ln2_b"]
    B, L = input_ids.shape
    return h.reshape(B, L, -1)


if __name__ == "__main__":
    # config: vocab_size=64, word_vec_size=32, hidden_size=32, eps=1e-12
    VOCAB, D, H = 64, 32, 32
    B, L = 2, 8

    key = jax.random.PRNGKey(0)
    k_ids, k_par = jax.random.split(key)
    params = init_params(k_par, VOCAB, D, H)
    input_ids = jax.random.randint(k_ids, (B, L), 0, VOCAB, dtype=jnp.int32)

    out = text_embedding_forward(input_ids, params)
    out = jax.block_until_ready(out)

    ref = reference_forward(input_ids, params)
    assert out.shape == (B, L, H)
    assert bool(jnp.isfinite(out).all())
    # matmul operands are bf16 (MXU-native) -> compare vs f32 reference with
    # bf16-appropriate tolerance; LN/elementwise math is f32 inside the kernel.
    assert jnp.allclose(out, ref, atol=2e-2, rtol=2e-2), "mismatch vs reference"
    print("KERNEL_OK")
</pallas_src>

<mosaic_0001>
module attributes {stable_mosaic.version = 11 : i64} {
  func.func @_text_embed_fc_kernel(%arg0: i32, %arg1: memref<16xi32, #tpu.memory_space<smem>>, %arg2: memref<64x128xf32, #tpu.memory_space<any>>, %arg3: memref<2x128xf32, #tpu.memory_space<vmem>>, %arg4: memref<128x128xbf16, #tpu.memory_space<vmem>>, %arg5: memref<3x128xf32, #tpu.memory_space<vmem>>, %arg6: memref<8x128xf32, #tpu.memory_space<vmem>>, %arg7: memref<8x128xf32, #tpu.memory_space<vmem>>, %arg8: memref<!tpu.dma_semaphore, #tpu.memory_space<semaphore_mem>>) attributes {dimension_semantics = [#tpu.dimension_semantics<parallel>], iteration_bounds = array<i64: 2>, scalar_prefetch = 1 : i64, scratch_operands = 2 : i64, tpu.core_type = #tpu.core_type<tc>, window_params = [{}, {pipeline_mode = #tpu.pipeline_mode<synchronous>, transform_indices = @transform_1, window_bounds = array<i64: 2, 128>}, {pipeline_mode = #tpu.pipeline_mode<synchronous>, transform_indices = @transform_2, window_bounds = array<i64: 128, 128>}, {pipeline_mode = #tpu.pipeline_mode<synchronous>, transform_indices = @transform_3, window_bounds = array<i64: 3, 128>}, {transform_indices = @transform_4, window_bounds = array<i64: 8, 128>}]} {
    %c8_i32 = arith.constant 8 : i32
    %0 = arith.muli %arg0, %c8_i32 : i32
    %c0_i32 = arith.constant 0 : i32
    %c8_i32_0 = arith.constant 8 : i32
    %1 = arith.addi %c0_i32, %c8_i32_0 : i32
    %c1_i32 = arith.constant 1 : i32
    scf.for %arg9 = %c0_i32 to %1 step %c1_i32  : i32 {
      %c1_i32_28 = arith.constant 1 : i32
      %73 = arith.muli %arg9, %c1_i32_28 : i32
      %c0_i32_29 = arith.constant 0 : i32
      %74 = arith.addi %c0_i32_29, %73 : i32
      %75 = arith.addi %0, %74 : i32
      %76 = arith.index_cast %75 : i32 to index
      %77 = memref.load %arg1[%76] : memref<16xi32, #tpu.memory_space<smem>>
      %c0_i32_30 = arith.constant 0 : i32
      %78 = tpu.memref_slice %arg2[%77, %c0_i32_30] : memref<64x128xf32, #tpu.memory_space<any>> -> memref<1x128xf32, #tpu.memory_space<any>>
      %c0_i32_31 = arith.constant 0 : i32
      %79 = tpu.memref_slice %arg7[%74, %c0_i32_31] : memref<8x128xf32, #tpu.memory_space<vmem>> -> memref<1x128xf32, #tpu.memory_space<vmem>>
      tpu.enqueue_dma source(%78 : memref<1x128xf32, #tpu.memory_space<any>>) target(%79 : memref<1x128xf32, #tpu.memory_space<vmem>>) target_semaphore(%arg8 : memref<!tpu.dma_semaphore, #tpu.memory_space<semaphore_mem>>)
    }
    %c8_i32_1 = arith.constant 8 : i32
    %c0_i32_2 = arith.constant 0 : i32
    %c8_i32_3 = arith.constant 8 : i32
    %2 = arith.addi %c0_i32_2, %c8_i32_3 : i32
    %c1_i32_4 = arith.constant 1 : i32
    scf.for %arg9 = %c0_i32_2 to %2 step %c1_i32_4  : i32 {
      %c0_i32_28 = arith.constant 0 : i32
      %c0_i32_29 = arith.constant 0 : i32
      %73 = tpu.memref_slice %arg2[%c0_i32_28, %c0_i32_29] : memref<64x128xf32, #tpu.memory_space<any>> -> memref<1x128xf32, #tpu.memory_space<any>>
      %c0_i32_30 = arith.constant 0 : i32
      %c0_i32_31 = arith.constant 0 : i32
      %74 = tpu.memref_slice %arg7[%c0_i32_30, %c0_i32_31] : memref<8x128xf32, #tpu.memory_space<vmem>> -> memref<1x128xf32, #tpu.memory_space<vmem>>
      tpu.wait_dma2 semaphore(%arg8 : memref<!tpu.dma_semaphore, #tpu.memory_space<semaphore_mem>>) src(%73 : memref<1x128xf32, #tpu.memory_space<any>>) dst(%74 : memref<1x128xf32, #tpu.memory_space<vmem>>)
    }
    %c0 = arith.constant 0 : index
    %c0_5 = arith.constant 0 : index
    %3 = vector.load %arg7[%c0, %c0_5] : memref<8x128xf32, #tpu.memory_space<vmem>>, vector<8x128xf32>
    %4 = tpu.iota {dimensions = array<i32: 1>} : vector<1x128xi32>
    %c32_i32 = arith.constant 32 : i32
    %5 = vector.broadcast %c32_i32 : i32 to vector<1x128xi32>
    %6 = arith.cmpi slt, %4, %5 : vector<1x128xi32>
    %cst = arith.constant dense<0.000000e+00> : vector<8xf32>
    %7 = vector.multi_reduction <add>, %3, %cst [1] : vector<8x128xf32> to vector<8xf32>
    %8 = vector.shape_cast %7 : vector<8xf32> to vector<8x1xf32>
    %cst_6 = arith.constant 3.125000e-02 : f32
    %9 = vector.broadcast %cst_6 : f32 to vector<8x1xf32>
    %10 = arith.mulf %8, %9 : vector<8x1xf32>
    %11 = vector.broadcast %10 : vector<8x1xf32> to vector<8x128xf32>
    %12 = arith.subf %3, %11 : vector<8x128xf32>
    %cst_7 = arith.constant 0.000000e+00 : f32
    %13 = vector.shape_cast %6 : vector<1x128xi1> to vector<1x128xi1>
    %14 = vector.broadcast %13 : vector<1x128xi1> to vector<8x128xi1>
    %15 = vector.broadcast %cst_7 : f32 to vector<8x128xf32>
    %16 = arith.select %14, %12, %15 : vector<8x128xi1>, vector<8x128xf32>
    %17 = arith.mulf %16, %16 : vector<8x128xf32>
    %cst_8 = arith.constant dense<0.000000e+00> : vector<8xf32>
    %18 = vector.multi_reduction <add>, %17, %cst_8 [1] : vector<8x128xf32> to vector<8xf32>
    %19 = vector.shape_cast %18 : vector<8xf32> to vector<8x1xf32>
    %cst_9 = arith.constant 3.125000e-02 : f32
    %20 = vector.broadcast %cst_9 : f32 to vector<8x1xf32>
    %21 = arith.mulf %19, %20 : vector<8x1xf32>
    %c0_10 = arith.constant 0 : index
    %c0_11 = arith.constant 0 : index
    %22 = vector.load %arg3[%c0_10, %c0_11] : memref<2x128xf32, #tpu.memory_space<vmem>>, vector<2x128xf32>
    %cst_12 = arith.constant 9.99999996E-13 : f32
    %23 = vector.broadcast %cst_12 : f32 to vector<8x1xf32>
    %24 = arith.addf %21, %23 : vector<8x1xf32>
    %25 = math.rsqrt %24 : vector<8x1xf32>
    %26 = vector.broadcast %25 : vector<8x1xf32> to vector<8x128xf32>
    %27 = arith.mulf %16, %26 : vector<8x128xf32>
    %28 = vector.extract_strided_slice %22 {offsets = [0, 0], sizes = [1, 128], strides = [1, 1]} : vector<2x128xf32> to vector<1x128xf32>
    %29 = vector.broadcast %28 : vector<1x128xf32> to vector<8x128xf32>
    %30 = arith.mulf %27, %29 : vector<8x128xf32>
    %31 = vector.extract_strided_slice %22 {offsets = [1, 0], sizes = [1, 128], strides = [1, 1]} : vector<2x128xf32> to vector<1x128xf32>
    %32 = vector.broadcast %31 : vector<1x128xf32> to vector<8x128xf32>
    %33 = arith.addf %30, %32 : vector<8x128xf32>
    %c0_13 = arith.constant 0 : index
    %c0_14 = arith.constant 0 : index
    %34 = vector.load %arg5[%c0_13, %c0_14] : memref<3x128xf32, #tpu.memory_space<vmem>>, vector<3x128xf32>
    %35 = arith.truncf %33 : vector<8x128xf32> to vector<8x128xbf16>
    %c0_15 = arith.constant 0 : index
    %c0_16 = arith.constant 0 : index
    %36 = vector.load %arg4[%c0_15, %c0_16] : memref<128x128xbf16, #tpu.memory_space<vmem>>, vector<128x128xbf16>
    %cst_17 = arith.constant dense<0.000000e+00> : vector<8x128xf32>
    %37 = tpu.matmul %35, %36, %cst_17 {dimension_numbers = #tpu.dot_dimension_numbers<[1], [0], [0], [1], [0, 0, 1, 1], [], []>} : vector<8x128xbf16>, vector<128x128xbf16>, vector<8x128xf32> -> vector<8x128xf32>
    %38 = vector.extract_strided_slice %34 {offsets = [0, 0], sizes = [1, 128], strides = [1, 1]} : vector<3x128xf32> to vector<1x128xf32>
    %39 = vector.broadcast %38 : vector<1x128xf32> to vector<8x128xf32>
    %40 = arith.addf %37, %39 : vector<8x128xf32>
    %cst_18 = arith.constant 0.000000e+00 : f32
    %41 = vector.broadcast %cst_18 : f32 to vector<8x128xf32>
    %42 = arith.maximumf %40, %41 : vector<8x128xf32>
    %43 = tpu.iota {dimensions = array<i32: 1>} : vector<1x128xi32>
    %c32_i32_19 = arith.constant 32 : i32
    %44 = vector.broadcast %c32_i32_19 : i32 to vector<1x128xi32>
    %45 = arith.cmpi slt, %43, %44 : vector<1x128xi32>
    %cst_20 = arith.constant dense<0.000000e+00> : vector<8xf32>
    %46 = vector.multi_reduction <add>, %42, %cst_20 [1] : vector<8x128xf32> to vector<8xf32>
    %47 = vector.shape_cast %46 : vector<8xf32> to vector<8x1xf32>
    %cst_21 = arith.constant 3.125000e-02 : f32
    %48 = vector.broadcast %cst_21 : f32 to vector<8x1xf32>
    %49 = arith.mulf %47, %48 : vector<8x1xf32>
    %50 = vector.broadcast %49 : vector<8x1xf32> to vector<8x128xf32>
    %51 = arith.subf %42, %50 : vector<8x128xf32>
    %cst_22 = arith.constant 0.000000e+00 : f32
    %52 = vector.shape_cast %45 : vector<1x128xi1> to vector<1x128xi1>
    %53 = vector.broadcast %52 : vector<1x128xi1> to vector<8x128xi1>
    %54 = vector.broadcast %cst_22 : f32 to vector<8x128xf32>
    %55 = arith.select %53, %51, %54 : vector<8x128xi1>, vector<8x128xf32>
    %56 = arith.mulf %55, %55 : vector<8x128xf32>
    %cst_23 = arith.constant dense<0.000000e+00> : vector<8xf32>
    %57 = vector.multi_reduction <add>, %56, %cst_23 [1] : vector<8x128xf32> to vector<8xf32>
    %58 = vector.shape_cast %57 : vector<8xf32> to vector<8x1xf32>
    %cst_24 = arith.constant 3.125000e-02 : f32
    %59 = vector.broadcast %cst_24 : f32 to vector<8x1xf32>
    %60 = arith.mulf %58, %59 : vector<8x1xf32>
    %cst_25 = arith.constant 9.99999996E-13 : f32
    %61 = vector.broadcast %cst_25 : f32 to vector<8x1xf32>
    %62 = arith.addf %60, %61 : vector<8x1xf32>
    %63 = math.rsqrt %62 : vector<8x1xf32>
    %64 = vector.broadcast %63 : vector<8x1xf32> to vector<8x128xf32>
    %65 = arith.mulf %55, %64 : vector<8x128xf32>
    %66 = vector.extract_strided_slice %34 {offsets = [1, 0], sizes = [1, 128], strides = [1, 1]} : vector<3x128xf32> to vector<1x128xf32>
    %67 = vector.broadcast %66 : vector<1x128xf32> to vector<8x128xf32>
    %68 = arith.mulf %65, %67 : vector<8x128xf32>
    %69 = vector.extract_strided_slice %34 {offsets = [2, 0], sizes = [1, 128], strides = [1, 1]} : vector<3x128xf32> to vector<1x128xf32>
    %70 = vector.broadcast %69 : vector<1x128xf32> to vector<8x128xf32>
    %71 = arith.addf %68, %70 : vector<8x128xf32>
    %c0_26 = arith.constant 0 : index
    %c0_27 = arith.constant 0 : index
    %72 = vector.load %arg6[%c0_26, %c0_27] : memref<8x128xf32, #tpu.memory_space<vmem>>, vector<8x128xf32>
    tpu.vector_store %arg6[%c0_26, %c0_27], %71 {strides = array<i32>} : memref<8x128xf32, #tpu.memory_space<vmem>>, vector<8x128xf32>,
    return
  }
  func.func @transform_1(%arg0: i32, %arg1: memref<16xi32, #tpu.memory_space<smem>>) -> (i32, i32) {
    %c0_i32 = arith.constant 0 : i32
    %c0_i32_0 = arith.constant 0 : i32
    %c0_i32_1 = arith.constant 0 : i32
    return %c0_i32, %c0_i32_0 : i32, i32
  }
  func.func @transform_2(%arg0: i32, %arg1: memref<16xi32, #tpu.memory_space<smem>>) -> (i32, i32) {
    %c0_i32 = arith.constant 0 : i32
    %c0_i32_0 = arith.constant 0 : i32
    %c0_i32_1 = arith.constant 0 : i32
    return %c0_i32, %c0_i32_0 : i32, i32
  }
  func.func @transform_3(%arg0: i32, %arg1: memref<16xi32, #tpu.memory_space<smem>>) -> (i32, i32) {
    %c0_i32 = arith.constant 0 : i32
    %c0_i32_0 = arith.constant 0 : i32
    %c0_i32_1 = arith.constant 0 : i32
    return %c0_i32, %c0_i32_0 : i32, i32
  }
  func.func @transform_4(%arg0: i32, %arg1: memref<16xi32, #tpu.memory_space<smem>>) -> (i32, i32) {
    %c0_i32 = arith.constant 0 : i32
    %c0_i32_0 = arith.constant 0 : i32
    return %arg0, %c0_i32 : i32, i32
  }
}

</mosaic_0001>

<llo_original>
// kernel: tpu_custom_call.1
$region0: #{tpu_custom_call.1}
  #allocation0 [shape = 'u32[]', space=smem, size = 0x4, offset = 0x4, fixed_abs, tag = 'smem constant byte address 0x4 - core index']
  #allocation1 [shape = 'u32[144,128]{1,0:T(1,128)}', space=vmem, size = 0x12000, scoped, tag = 'internal scratch']
  #allocation2 [shape = 'f32[8,128]{1,0:T(8,128)}', space=vmem, size = 0x1000, scoped, tag = 'scratch operand']
  #allocation3 [shape = 's32[1]{0}', space=sflag, size = 0x4, scoped, tag = 'scratch operand']
  #allocation4 [shape = 's32[1]{0}', space=sflag, size = 0x4, scoped, tag = 'scoped memory for tpu_custom_call.1']
  #allocation5 [shape = 'u8[512]{0}', space=smem, size = 0x200, scoped, tag = 'prefetched SMEM operand 0']
  #allocation10 [shape = 's32[]', space=sflag, size = 0x4, offset = 0, fixed_abs, tag = 'sflag constant byte address 0x0 - dummy sync flag']
  #allocation11 [shape = 's32[]', space=sflag, size = 0x4, offset = 0, fixed_abs, tag = 'sflag constant byte address 0x0 - dummy sync flag']
  #allocation12 [shape = 'u32[]', space=smem, size = 0x4, offset = 0x44, fixed_abs, tag = 'smem constant byte address 0x44 - assertion arg 0']
  #allocation13 [shape = 'u32[]', space=smem, size = 0x4, offset = 0x48, fixed_abs, tag = 'smem constant byte address 0x48 - assertion arg 1']
  %s0 = inlined_call_operand.hbm [shape: s32[16], index: 0, kind: input, shape index: {}]
  %s1 = inlined_call_operand.hbm [shape: f32[64,128], index: 1, kind: input, shape index: {}]
  %s2 = inlined_call_operand.vmem [shape: f32[2,128], index: 2, kind: input, shape index: {}]
  %s3 = inlined_call_operand.hbm [shape: bf16[128,128], index: 3, kind: input, shape index: {}]
  %s4 = inlined_call_operand.vmem [shape: f32[3,128], index: 4, kind: input, shape index: {}]
  %s5 = inlined_call_operand.hbm [shape: f32[16,128], index: 5, kind: output, shape index: {}]
  %s6 = sld [smem:[#allocation0]]
  $region67: #{tpu_custom_call.1} parent=0
    _
  %s8 = ssub.s32 1, %s6
  %s9 = scalar_select 0, %s8, %s6
  %11 = dma.hbm_to_smem %s0, 16, [#allocation5], [#allocation4]
  %12 = dma.done [#allocation4], 16
  %13 = sfence
  $region1: #{tpu_custom_call.1} parent=0
    #allocation6 [shape = 'u8[32768]{0}', space=vmem, size = 0x8000, scoped, tag = 'input window, operand 3, single buffered']
    #allocation7 [shape = 's32[2]{0}', space=sflag, size = 0x8, scoped, tag = 'scoped memory for tpu_custom_call.1']
    #allocation8 [shape = 's32[2]{0}', space=sflag, size = 0x8, scoped, tag = 'scoped memory for tpu_custom_call.1']
    #allocation9 [shape = 'u8[8192]{0}', space=vmem, size = 0x2000, scoped, tag = 'output window, operand 0']
    %14 = vsyncpa [#allocation7], 0
    %15 = vsyncpa [#allocation8], 0
    %s16 = scalar_lea.sflag [#allocation8], 1
    %17 = vsyncpa %s16, 0
    loop: start=0, step=1, limit=4
    $region2: #{tpu_custom_call.1} parent=1 // loop_pre_header
      _
    $region3: #{tpu_custom_call.1} parent=1 // loop_header
      %s19 = sphi 0, %s23
      %p20 = scmp.ge.s32.totalorder %s19, 4
      %s27 = sphi 0, %s27
      %s29 = sphi 0, %s27
      %s30 = sphi 0, %s29
      %s44 = sphi 0, %s30
      %s48 = sphi 0, %s48
      %s50 = sphi 0, %s48
      %s51 = sphi 0, %s50
      %s65 = sphi 0, %s51
      %s69 = sphi 0, %s69
      %s71 = sphi 0, %s69
      %s72 = sphi 0, %s71
      %s86 = sphi 0, %s72
      %s92 = sphi 0, %s94
      %s95 = sphi 0, %s92
      %s96 = sphi 0, %s95
      %s112 = sphi 0, %s96
    $region4: #{tpu_custom_call.1} parent=1 // loop_header_branch
      %22 = sbr.rel (%p20) target = $region8
    $region5: #{tpu_custom_call.1} parent=1 // loop_body
      %s24 = ssub.s32 %s19, 1
      %s25 = ssub.s32 %s19, 2
      %s26 = sadd.s32 %s19, 1
      %s28 = sadd.s32 %s27, 1
      %p31 = scmp.eq.s32.totalorder %s19, 1
      %p32 = scmp.ne.s32.totalorder %s27, %s29
      %p33 = scmp.eq.s32.totalorder %s19, 0
      %p34 = por %p32, %p33
      %p35 = scmp.ne.s32.totalorder %s27, %s29
      %p36 = scmp.eq.s32.totalorder %s24, 1
      %p37 = por %p35, %p36
      %p38 = scmp.ne.s32.totalorder %s29, %s30
      %p39 = scmp.eq.s32.totalorder %s24, 0
      %p40 = por %p38, %p39
      %p41 = scmp.ne.s32.totalorder %s29, %s30
      %p42 = scmp.eq.s32.totalorder %s25, 1
      %p43 = por %p41, %p42
      %p45 = scmp.ne.s32.totalorder %s30, %s44
      %p46 = scmp.eq.s32.totalorder %s25, 0
      %p47 = por %p45, %p46
      %s49 = sadd.s32 %s48, 1
      %p52 = scmp.eq.s32.totalorder %s19, 1
      %p53 = scmp.ne.s32.totalorder %s48, %s50
      %p54 = scmp.eq.s32.totalorder %s19, 0
      %p55 = por %p53, %p54
      %p56 = scmp.ne.s32.totalorder %s48, %s50
      %p57 = scmp.eq.s32.totalorder %s24, 1
      %p58 = por %p56, %p57
      %p59 = scmp.ne.s32.totalorder %s50, %s51
      %p60 = scmp.eq.s32.totalorder %s24, 0
      %p61 = por %p59, %p60
      %p62 = scmp.ne.s32.totalorder %s50, %s51
      %p63 = scmp.eq.s32.totalorder %s25, 1
      %p64 = por %p62, %p63
      %p66 = scmp.ne.s32.totalorder %s51, %s65
      %p67 = scmp.eq.s32.totalorder %s25, 0
      %p68 = por %p66, %p67
      %s70 = sadd.s32 %s69, 1
      %p73 = scmp.eq.s32.totalorder %s19, 1
      %p74 = scmp.ne.s32.totalorder %s69, %s71
      %p75 = scmp.eq.s32.totalorder %s19, 0
      %p76 = por %p74, %p75
      %p77 = scmp.ne.s32.totalorder %s69, %s71
      %p78 = scmp.eq.s32.totalorder %s24, 1
      %p79 = por %p77, %p78
      %p80 = scmp.ne.s32.totalorder %s71, %s72
      %p81 = scmp.eq.s32.totalorder %s24, 0
      %p82 = por %p80, %p81
      %p83 = scmp.ne.s32.totalorder %s71, %s72
      %p84 = scmp.eq.s32.totalorder %s25, 1
      %p85 = por %p83, %p84
      %p87 = scmp.ne.s32.totalorder %s72, %s86
      %p88 = scmp.eq.s32.totalorder %s25, 0
      %p89 = por %p87, %p88
      %s90 = ssub.s32 %s19, %s26
      %p91 = scmp.eq.s32.totalorder %s90, 0
      %s93 = sadd.s32 %s92, 1
      %s94 = scalar_select %p91, %s92, %s93
      %p97 = pneg %p91
      %p98 = scmp.eq.s32.totalorder %s19, 1
      %p99 = por %p97, %p98
      %p100 = scmp.ne.s32.totalorder %s92, %s95
      %p101 = scmp.eq.s32.totalorder %s19, 0
      %p102 = por %p100, %p101
      %p103 = scmp.ne.s32.totalorder %s92, %s95
      %p104 = scmp.eq.s32.totalorder %s24, 1
      %p105 = por %p103, %p104
      %p106 = scmp.ne.s32.totalorder %s95, %s96
      %p107 = scmp.eq.s32.totalorder %s24, 0
      %p108 = por %p106, %p107
      %p109 = scmp.ne.s32.totalorder %s95, %s96
      %p110 = scmp.eq.s32.totalorder %s25, 1
      %p111 = por %p109, %p110
      %p113 = scmp.ne.s32.totalorder %s96, %s112
      %p114 = scmp.eq.s32.totalorder %s25, 0
      %p115 = por %p113, %p114
      %p116 = scmp.le.s32.totalorder 1, %s19
      %p117 = scmp.lt.s32.totalorder %s19, 3
      %p118 = pnand %p116, %p117
      %p119 = pneg %p118
      // Predicated region
      $region9: #{tpu_custom_call.1} parent=5 // pred_check
        _
      $region10: #{tpu_custom_call.1} parent=5 // pred_check_branch
        %121 = sbr.rel (%p118) target = $region12
      $region11: #{tpu_custom_call.1} parent=5 // pred_region
        %s122 = ssub.s32 %s19, 1
        // Predicated region
        $region13: #{tpu_custom_call.1} parent=11 // pred_check
          %p123 = pneg %p40
        $region14: #{tpu_custom_call.1} parent=11 // pred_check_branch
          %125 = sbr.rel (%p123) target = $region16
        $region15: #{tpu_custom_call.1} parent=11 // pred_region
          _
        $region16: #{tpu_custom_call.1} parent=11 // pred_fallthru
          _
        // Predicated region
        $region17: #{tpu_custom_call.1} parent=11 // pred_check
          %p126 = pneg %p61
        $region18: #{tpu_custom_call.1} parent=11 // pred_check_branch
          %128 = sbr.rel (%p126) target = $region20
        $region19: #{tpu_custom_call.1} parent=11 // pred_region
          %s130 = ssub.s32 1024, 1024
          %131 = vsyncadd [#allocation7], %s130
          %s132 = sshll.u32 [#allocation6], 4
          %s133 = int_to_ptr.vmem [resolvable:$true] %s132
          %138 = dma.hbm_to_vmem [thread:$0]  %s3, 1024, %s133, [#allocation7], 64, 64, 4
        $region20: #{tpu_custom_call.1} parent=11 // pred_fallthru
          _
        // Predicated region
        $region21: #{tpu_custom_call.1} parent=11 // pred_check
          %p139 = pneg %p82
        $region22: #{tpu_custom_call.1} parent=11 // pred_check_branch
          %141 = sbr.rel (%p139) target = $region24
        $region23: #{tpu_custom_call.1} parent=11 // pred_region
          _
        $region24: #{tpu_custom_call.1} parent=11 // pred_fallthru
          _
      $region12: #{tpu_custom_call.1} parent=5 // pred_fallthru
        _
      %p142 = scmp.lt.s32.totalorder %s19, 2
      // Predicated region
      $region25: #{tpu_custom_call.1} parent=5 // pred_check
        %p143 = pneg %p142
      $region26: #{tpu_custom_call.1} parent=5 // pred_check_branch
        %145 = sbr.rel (%p143) target = $region28
      $region27: #{tpu_custom_call.1} parent=5 // pred_region
        _
      $region28: #{tpu_custom_call.1} parent=5 // pred_fallthru
        _
      %p146 = scmp.le.s32.totalorder 1, %s19
      %p147 = scmp.lt.s32.totalorder %s19, 3
      %p148 = pnand %p146, %p147
      %p149 = pneg %p148
      // Predicated region
      $region29: #{tpu_custom_call.1} parent=5 // pred_check
        _
      $region30: #{tpu_custom_call.1} parent=5 // pred_check_branch
        %151 = sbr.rel (%p148) target = $region32
      $region31: #{tpu_custom_call.1} parent=5 // pred_region
        %s152 = ssub.s32 %s19, 1
        // Predicated region
        $region33: #{tpu_custom_call.1} parent=31 // pred_check
          %p153 = pneg %p61
        $region34: #{tpu_custom_call.1} parent=31 // pred_check_branch
          %155 = sbr.rel (%p153) target = $region36
        $region35: #{tpu_custom_call.1} parent=31 // pred_region
          %156 = dma.done [#allocation7], 1024
        $region36: #{tpu_custom_call.1} parent=31 // pred_fallthru
          _
        %p157 = pneg %p40
        %p158 = pneg %p37
        %p159 = pneg %p61
        %p160 = pneg %p58
        %p161 = pneg %p82
        %p162 = pneg %p79
        %p163 = pneg %p108
        %p164 = pneg %p105
        %s165 = sand.u32 %s95, 1
        %s166 = scalar_lea.sflag [#allocation8], %s165
        %s167 = sand.u32 %s95, 1
        %s168 = smul.addr %s167, 8
        %s169 = scalar_lea.vmem [#allocation9], %s168
        %s171 = smul.u32 %s24, 8
        loop: start=0, step=1, limit=8
        $region37: #{tpu_custom_call.1} parent=31 // loop_pre_header
          _
        $region38: #{tpu_custom_call.1} parent=31 // loop_header
          %s173 = sphi 0, %s177
          %p174 = scmp.ge.s32.totalorder %s173, 8
        $region39: #{tpu_custom_call.1} parent=31 // loop_header_branch
          %176 = sbr.rel (%p174) target = $region43
        $region40: #{tpu_custom_call.1} parent=31 // loop_body
          %s178 = sadd.s32 %s171, %s173
          %s179 = sld [smem:[#allocation5 + %s178]]
          %s180 = smul.addr %s179, 16
          %s181 = scalar_lea.hbm %s1, %s180
          %s182 = scalar_lea.vmem [#allocation2], %s173
          // Predicated region
          $region44: #{tpu_custom_call.1} parent=40 // pred_check
            _
          $region45: #{tpu_custom_call.1} parent=40 // pred_check_branch
            %184 = sbr.rel target = $region47
          $region46: #{tpu_custom_call.1} parent=40 // pred_region
            %185 = sst [smem:[#allocation12]] [#allocation11]
            %186 = sst [smem:[#allocation13]] [#allocation10]
          $region47: #{tpu_custom_call.1} parent=40 // pred_fallthru
            _
          %188 = shalt.err (0)
          %s190 = sshll.u32 %s182, 4
          %s191 = int_to_ptr.vmem [resolvable:$true] %s190
          %193 = dma.hbm_to_vmem [thread:$0]  %s181, 16, %s191, [#allocation3]
        $region41: #{tpu_custom_call.1} parent=31 // loop_footer
          %s177 = sadd.s32 1, %s173
        $region42: #{tpu_custom_call.1} parent=31 // loop_footer_branch
          %172 = sbr.rel target = $region38
        $region43: #{tpu_custom_call.1} parent=31 // loop_exit
          _
        loop: start=0, step=1, limit=8
        $region48: #{tpu_custom_call.1} parent=31 // loop_pre_header
          _
        $region49: #{tpu_custom_call.1} parent=31 // loop_header
          %s195 = sphi 0, %s199
          %p196 = scmp.ge.s32.totalorder %s195, 8
        $region50: #{tpu_custom_call.1} parent=31 // loop_header_branch
          %198 = sbr.rel (%p196) target = $region54
        $region51: #{tpu_custom_call.1} parent=31 // loop_body
          %s200 = smul.u32 1, 1
          %s201 = sshll.u32 %s200, 4
          %202 = dma.done [#allocation3], %s201
        $region52: #{tpu_custom_call.1} parent=31 // loop_footer
          %s199 = sadd.s32 1, %s195
        $region53: #{tpu_custom_call.1} parent=31 // loop_footer_branch
          %194 = sbr.rel target = $region49
        $region54: #{tpu_custom_call.1} parent=31 // loop_exit
          _
        %v203 = vld [vmem:[#allocation2] sm:$0xff]
        %v204 = vlaneseq
        %v205 = vand.u32 %v204, 127
        %vm206 = vcmp.lt.s32.totalorder %v205, 32
        %207 = vadd.xlane.f32.xlu0 %v203
        %v208 = vpop.xlane.xlu0 %207
        %v209 = vmul.f32 %v208, 0.03125
        %v210 = vsub.f32 %v203, %v209
        %v211 = vsel %vm206, 1, 0
        %vm212 = vcmp.eq.s32.totalorder %v211, 1
        %v213 = vsel %vm212, %v210, 0.0
        %v214 = vmul.f32 %v213, %v213
        %215 = vadd.xlane.f32.xlu0 %v214
        %v216 = vpop.xlane.xlu0 %215
        %v217 = vmul.f32 %v216, 0.03125
        %v218 = vld [vmem:[%s2] sm:$0x3]
        %v219 = vadd.f32 %v217, 1e-12
        %v220 = vrsqrt.pop %v219
        %v221 = vmul.f32 %v213, %v220
        %v222 = vlaneseq
        %v223 = vshrl.u32 %v222, 7
        %v224 = vsub.s32 0, %v223
        %v225 = vrot.slane %v218, %v224
        %v226 = vmul.f32 %v221, %v225
        %v227 = vlaneseq
        %v228 = vshrl.u32 %v227, 7
        %v229 = vsub.s32 1, %v228
        %v230 = vrot.slane %v218, %v229
        %v231 = vadd.f32 %v226, %v230
        %v232 = vld [vmem:[%s4] sm:$0x7]
        %v233 = vpack.c.bf16 %v231, %v231
        %v234 = vld [vmem:[#allocation6] sm:$0xf]
        %v235 = vld [vmem:[#allocation6 + $0x4] sm:$0xf]
        %v236 = vld [vmem:[#allocation6 + $0x8] sm:$0xf]
        %v237 = vld [vmem:[#allocation6 + $0xc] sm:$0xf]
        %v238 = vld [vmem:[#allocation6 + $0x10] sm:$0xf]
        %v239 = vld [vmem:[#allocation6 + $0x14] sm:$0xf]
        %v240 = vld [vmem:[#allocation6 + $0x18] sm:$0xf]
        %v241 = vld [vmem:[#allocation6 + $0x1c] sm:$0xf]
        %v242 = vld [vmem:[#allocation6 + $0x20] sm:$0xf]
        %v243 = vld [vmem:[#allocation6 + $0x24] sm:$0xf]
        %v244 = vld [vmem:[#allocation6 + $0x28] sm:$0xf]
        %v245 = vld [vmem:[#allocation6 + $0x2c] sm:$0xf]
        %v246 = vld [vmem:[#allocation6 + $0x30] sm:$0xf]
        %v247 = vld [vmem:[#allocation6 + $0x34] sm:$0xf]
        %v248 = vld [vmem:[#allocation6 + $0x38] sm:$0xf]
        %v249 = vld [vmem:[#allocation6 + $0x3c] sm:$0xf]
        %v250 = vlaneseq
        %v251 = vshrl.u32 %v250, 7
        %v252 = vsub.s32 0, %v251
        %v253 = vrot.slane %v232, %v252
        %v270 = vunpack.c.l.b16 %v234
        %v271 = vunpack.c.l.b16 %v235
        %v272 = vunpack.c.l.b16 %v236
        %v273 = vunpack.c.l.b16 %v237
        %v274 = vunpack.c.l.b16 %v238
        %v275 = vunpack.c.l.b16 %v239
        %v276 = vunpack.c.l.b16 %v240
        %v277 = vunpack.c.l.b16 %v241
        %v278 = vunpack.c.l.b16 %v242
        %v279 = vunpack.c.l.b16 %v243
        %v280 = vunpack.c.l.b16 %v244
        %v281 = vunpack.c.l.b16 %v245
        %v282 = vunpack.c.l.b16 %v246
        %v283 = vunpack.c.l.b16 %v247
        %v284 = vunpack.c.l.b16 %v248
        %v285 = vunpack.c.l.b16 %v249
        %v286 = vpack.c.b16 %v271, %v270
        %v287 = vpack.c.b16 %v273, %v272
        %v288 = vpack.c.b16 %v275, %v274
        %v289 = vpack.c.b16 %v277, %v276
        %v290 = vpack.c.b16 %v279, %v278
        %v291 = vpack.c.b16 %v281, %v280
        %v292 = vpack.c.b16 %v283, %v282
        %v293 = vpack.c.b16 %v285, %v284
        %302 = vmatprep.subr.bf16.mxu0 0
        %303 = vmatpush1.bf16.msra.mxu0 %v286
        %304 = vmatprep.subr.bf16.mxu0 0
        %305 = vmatpush1.bf16.msra.mxu0 %v287
        %306 = vmatprep.subr.bf16.mxu0 0
        %307 = vmatpush1.bf16.msra.mxu0 %v288
        %308 = vmatprep.subr.bf16.mxu0 0
        %309 = vmatpush1.bf16.msra.mxu0 %v289
        %310 = vmatprep.subr.bf16.mxu0 0
        %311 = vmatpush1.bf16.msra.mxu0 %v290
        %312 = vmatprep.subr.bf16.mxu0 0
        %313 = vmatpush1.bf16.msra.mxu0 %v291
        %314 = vmatprep.subr.bf16.mxu0 0
        %315 = vmatpush1.bf16.msra.mxu0 %v292
        %316 = vmatprep.subr.bf16.mxu0 0
        %317 = vmatpush1.bf16.msra.mxu0 %v293
        %318 = vmatprep.subr.bf16.mxu0 0
        %319 = vmatpush1.bf16.msra.mxu0 0
        %320 = vmatprep.subr.bf16.mxu0 0
        %321 = vmatpush1.bf16.msra.mxu0 0
        %322 = vmatprep.subr.bf16.mxu0 0
        %323 = vmatpush1.bf16.msra.mxu0 0
        %324 = vmatprep.subr.bf16.mxu0 0
        %325 = vmatpush1.bf16.msra.mxu0 0
        %326 = vmatprep.subr.bf16.mxu0 0
        %327 = vmatpush1.bf16.msra.mxu0 0
        %328 = vmatprep.subr.bf16.mxu0 0
        %329 = vmatpush1.bf16.msra.mxu0 0
        %330 = vmatprep.subr.bf16.mxu0 0
        %331 = vmatpush1.bf16.msra.mxu0 0
        %332 = vmatprep.subr.bf16.mxu0 0
        %333 = vmatpush1.bf16.msra.mxu0 0
        %334 = vmatprep.mubr.bf16.mxu0 0
        %335 = vmatmul.mubr.bf16.gmra.mrb[0].mxu0 %v233
        %v336 = vpop.f32.mrb[0].mxu0
        %v337 = vadd.f32 %v253, %v336
        %v338 = vpop.f32.mrb[0].mxu0
        %v339 = vpop.f32.mrb[0].mxu0
        %v340 = vpop.f32.mrb[0].mxu0
        %341 = vdwg.mxu0
        %v342 = vmax.f32 %v337, 0.0
        %343 = vadd.xlane.f32.xlu0 %v342
        %v344 = vpop.xlane.xlu0 %343
        %v345 = vmul.f32 %v344, 0.03125
        %v346 = vsub.f32 %v342, %v345
        %v347 = vsel %vm212, %v346, 0.0
        %v348 = vmul.f32 %v347, %v347
        %349 = vadd.xlane.f32.xlu0 %v348
        %v350 = vpop.xlane.xlu0 %349
        %v351 = vmul.f32 %v350, 0.03125
        %v352 = vadd.f32 %v351, 1e-12
        %v353 = vrsqrt.pop %v352
        %v354 = vmul.f32 %v347, %v353
        %v355 = vlaneseq
        %v356 = vshrl.u32 %v355, 7
        %v357 = vsub.s32 1, %v356
        %v358 = vrot.slane %v232, %v357
        %v359 = vmul.f32 %v354, %v358
        %v360 = vlaneseq
        %v361 = vshrl.u32 %v360, 7
        %v362 = vsub.s32 2, %v361
        %v363 = vrot.slane %v232, %v362
        %v364 = vadd.f32 %v359, %v363
        %365 = vst [vmem:[%s169] sm:$0xff] %v364
        %s366 = sand.u32 %s95, 1
        %s367 = scalar_lea.sflag [#allocation8], %s366
        %s368 = sand.u32 %s95, 1
        %s369 = smul.addr %s368, 8
        %s370 = scalar_lea.vmem [#allocation9], %s369
        // Predicated region
        $region55: #{tpu_custom_call.1} parent=31 // pred_check
          %p371 = pneg %p105
        $region56: #{tpu_custom_call.1} parent=31 // pred_check_branch
          %373 = sbr.rel (%p371) target = $region58
        $region57: #{tpu_custom_call.1} parent=31 // pred_region
          %s375 = ssub.s32 128, 128
          %376 = vsyncadd %s367, %s375
          %s377 = smul.addr %s24, 128
          %s378 = scalar_lea.hbm %s5, %s377
          %s380 = sshll.u32 %s370, 4
          %s381 = int_to_ptr.vmem [resolvable:$true] %s380
          %383 = dma.vmem_to_hbm [thread:$0]  %s381, 128, %s378, %s367
        $region58: #{tpu_custom_call.1} parent=31 // pred_fallthru
          _
      $region32: #{tpu_custom_call.1} parent=5 // pred_fallthru
        _
      %p384 = scmp.le.s32.totalorder 2, %s19
      // Predicated region
      $region59: #{tpu_custom_call.1} parent=5 // pred_check
        %p385 = pneg %p384
      $region60: #{tpu_custom_call.1} parent=5 // pred_check_branch
        %387 = sbr.rel (%p385) target = $region62
      $region61: #{tpu_custom_call.1} parent=5 // pred_region
        %s388 = ssub.s32 %s19, 2
        // Predicated region
        $region63: #{tpu_custom_call.1} parent=61 // pred_check
          %p389 = pneg %p111
        $region64: #{tpu_custom_call.1} parent=61 // pred_check_branch
          %391 = sbr.rel (%p389) target = $region66
        $region65: #{tpu_custom_call.1} parent=61 // pred_region
          %s392 = sand.u32 %s96, 1
          %s393 = scalar_lea.sflag [#allocation8], %s392
          %s394 = sand.u32 %s96, 1
          %s395 = smul.addr %s394, 8
          %s396 = scalar_lea.vmem [#allocation9], %s395
          %397 = dma.done %s393, 128
        $region66: #{tpu_custom_call.1} parent=61 // pred_fallthru
          _
      $region62: #{tpu_custom_call.1} parent=5 // pred_fallthru
        _
    $region6: #{tpu_custom_call.1} parent=1 // loop_footer
      %s23 = sadd.s32 1, %s19
    $region7: #{tpu_custom_call.1} parent=1 // loop_footer_branch
      %18 = sbr.rel target = $region3
    $region8: #{tpu_custom_call.1} parent=1 // loop_exit
      _
    %398 = vsyncpa [#allocation7], 1
    %s399 = scalar_lea.sflag [#allocation7], 1
    %400 = vsyncpa %s399, 1
    %401 = vsyncpa [#allocation8], 1
    %s402 = scalar_lea.sflag [#allocation8], 1
    %403 = vsyncpa %s402, 1
  %404 = vsyncmov [#allocation3]
  %s405 = vpop.sfrf %404
  %p406 = scmp.eq.s32.totalorder %s405, 0
  %p407 = pneg %p406
  %409 = shalt.err (%p407)

</llo_original>
